<compile_context>
chip_gen: v6e
topology: v6e:2x2x1
jax: 0.10.0
libtpu: 0.0.40
codegen_flags: <defaults>
</compile_context>

<pallas_src>
import jax
import jax.numpy as jnp
from jax.experimental import pallas as pl
from jax.experimental.pallas import tpu as pltpu

LANE = 128  # lane width (last dim of a vreg)


def _round_up(x, m):
    return (x + m - 1) // m * m


def mlp_kernel(x_ref, w1_ref, b1_ref, w2_ref, b2_ref, o_ref):
    C = o_ref.shape[-1]
    # In-kernel bf16 cast of the activation tile (free VPU work, saves the
    # wrapper-side read+write pass over x).
    x = x_ref[...].astype(jnp.bfloat16)
    # fc1 on the MXU (K = D = 32 is fine; kernel is memory-bound anyway).
    h = jnp.dot(x, w1_ref[...], preferred_element_type=jnp.float32)
    # Bias add + ReLU in f32 on the VPU (v5e has no bf16 VPU path).
    h = jnp.maximum(h + b1_ref[...], 0.0)
    # fc2 on the MXU: lane-dense (C_pad = 128) matmul + bias add ...
    out = jnp.dot(h.astype(w2_ref.dtype), w2_ref[...],
                  preferred_element_type=jnp.float32)
    out = out + b2_ref[...]
    # ... but store only the C real logit columns (narrow masked store; cuts
    # HBM writeback ~64x vs storing the padded f32 tile).
    o_ref[...] = out[:, :C].astype(o_ref.dtype)


def prepare_params(w1, b1, w2, b2):
    """Pad + cast the weights/biases ONCE (call at init, reuse every forward).

    w1: (D, H)  b1: (1, H)  w2: (H, C)  b2: (1, C), all float32.
    """
    D, H = w1.shape
    C = w2.shape[1]
    H_pad = _round_up(H, LANE)
    C_pad = _round_up(C, LANE)

    w1_p = jnp.pad(w1, ((0, 0), (0, H_pad - H))).astype(jnp.bfloat16)
    b1_p = jnp.pad(b1.astype(jnp.float32).reshape(1, H),
                   ((0, 0), (0, H_pad - H)))
    w2_p = jnp.pad(w2, ((0, H_pad - H), (0, C_pad - C))).astype(jnp.bfloat16)
    b2_p = jnp.pad(b2.astype(jnp.float32).reshape(1, C),
                   ((0, 0), (0, C_pad - C)))
    return {"w1": w1_p, "b1": b1_p, "w2": w2_p, "b2": b2_p,
            "input_dim": D, "num_classes": C}


def fc_softmax_classifier(x, params, *, tile_b=None):
    """Forward pass (returns logits, matching the PyTorch module's forward).

    x: (B, D) float32.  params: output of prepare_params().
    """
    B, D = x.shape
    w1_p, b1_p = params["w1"], params["b1"]
    w2_p, b2_p = params["w2"], params["b2"]
    C = params["num_classes"]
    assert D == params["input_dim"]
    H_pad = w1_p.shape[1]
    C_pad = w2_p.shape[1]

    # Batch tiling: aim for >= 2 (ideally >= 4) grid steps so x/out DMAs
    # pipeline with MXU work and v7x's two TensorCores both get batch shards.
    if tile_b is None:
        tile_b = min(512, max(16, _round_up(pl.cdiv(B, 4), 16)))
    tile_b = _round_up(tile_b, 16)
    B_pad = _round_up(B, tile_b)
    grid = (B_pad // tile_b,)

    # x stays f32 and D-unpadded; only pad the batch dim if tile_b doesn't
    # divide it (padded rows are sliced off at the end).
    x_p = x if B_pad == B else jnp.pad(x, ((0, B_pad - B), (0, 0)))

    # Weights / biases never change across the grid: single-buffer them.
    resident = dict(pipeline_mode=pl.Buffered(1))

    cost = pl.CostEstimate(
        flops=2 * B_pad * (D * H_pad + H_pad * C_pad),
        transcendentals=0,
        bytes_accessed=(x_p.size * 4 + w1_p.size * 2 + w2_p.size * 2
                        + b1_p.size * 4 + b2_p.size * 4 + B_pad * C * 4),
    )

    # Explicit VMEM budget (rough upper bound + headroom), so larger tile_b/H
    # don't silently spill under the default scoped limit.
    vmem_est = (
        2 * tile_b * D * 4                      # x tiles, double-buffered, f32
        + w1_p.size * 2 + w2_p.size * 2         # bf16 weights, single-buffered
        + 8 * H_pad * 4 + 8 * C_pad * 4         # biases (sublane-padded)
        + 2 * tile_b * LANE * 4                 # out tiles, double-buffered
        + tile_b * H_pad * 6                    # h (f32) + bf16 copy
    )
    vmem_limit = min(64 << 20, max(32 << 20, 2 * vmem_est))

    out = pl.pallas_call(
        mlp_kernel,
        out_shape=jax.ShapeDtypeStruct((B_pad, C), jnp.float32),
        grid_spec=pltpu.PrefetchScalarGridSpec(
            num_scalar_prefetch=0,
            grid=grid,
            in_specs=[
                pl.BlockSpec((tile_b, D), lambda i: (i, 0)),                 # x tile (f32)
                pl.BlockSpec((D, H_pad), lambda i: (0, 0), **resident),      # w1 (bf16)
                pl.BlockSpec((1, H_pad), lambda i: (0, 0), **resident),      # b1 (f32)
                pl.BlockSpec((H_pad, C_pad), lambda i: (0, 0), **resident),  # w2 (bf16)
                pl.BlockSpec((1, C_pad), lambda i: (0, 0), **resident),      # b2 (f32)
            ],
            out_specs=pl.BlockSpec((tile_b, C), lambda i: (i, 0)),           # narrow logits
        ),
        compiler_params=pltpu.CompilerParams(
            dimension_semantics=("parallel",),
            vmem_limit_bytes=int(vmem_limit)),
        cost_estimate=cost,
    )(x_p, w1_p, b1_p, w2_p, b2_p)

    return out if B_pad == B else out[:B]


def init_params(key, input_dim, hidden_dim, num_classes):
    """Deterministic init mimicking nn.Linear (uniform +/- 1/sqrt(fan_in))."""
    k1, k2, k3, k4 = jax.random.split(key, 4)
    bound1 = 1.0 / jnp.sqrt(jnp.float32(input_dim))
    bound2 = 1.0 / jnp.sqrt(jnp.float32(hidden_dim))
    # Stored as (in, out): transposed w.r.t. PyTorch's (out, in) weight.
    w1 = jax.random.uniform(k1, (input_dim, hidden_dim), jnp.float32,
                            -bound1, bound1)
    b1 = jax.random.uniform(k2, (1, hidden_dim), jnp.float32, -bound1, bound1)
    w2 = jax.random.uniform(k3, (hidden_dim, num_classes), jnp.float32,
                            -bound2, bound2)
    b2 = jax.random.uniform(k4, (1, num_classes), jnp.float32,
                            -bound2, bound2)
    return w1, b1, w2, b2


if __name__ == "__main__":
    B = 32            # batch (small test; production would sweep tile_b 256-1024)
    INPUT_DIM = 32    # input feature dim
    HIDDEN_DIM = 256  # matches `hidden_dim = 256` in the reference script
    NUM_CLASSES = 2

    key = jax.random.PRNGKey(0)
    kx, kp = jax.random.split(key)
    x = jax.random.normal(kx, (B, INPUT_DIM), jnp.float32)
    w1, b1, w2, b2 = init_params(kp, INPUT_DIM, HIDDEN_DIM, NUM_CLASSES)

    # Pad/cast the weights ONCE (hoisted out of the per-call path).
    params = prepare_params(w1, b1, w2, b2)

    # tile_b=16 -> grid=(2,): >=2 grid steps so the batch axis pipelines and
    # can shard across both TensorCores on v7x.
    logits = fc_softmax_classifier(x, params, tile_b=16)
    logits = jax.block_until_ready(logits)

    # Reference check in plain JAX (same math as the PyTorch forward: logits,
    # no softmax).  Tolerance loosened for bf16 MXU operands (f32 accumulate).
    ref = jnp.maximum(x @ w1 + b1, 0.0) @ w2 + b2
    assert logits.shape == (B, NUM_CLASSES)
    assert jnp.allclose(logits, ref, atol=2e-2, rtol=2e-2), (
        float(jnp.max(jnp.abs(logits - ref))))

    print("KERNEL_OK")
</pallas_src>

<mosaic_0001>
module attributes {stable_mosaic.version = 11 : i64} {
  func.func @mlp_kernel(%arg0: i32, %arg1: memref<16x32xf32, #tpu.memory_space<vmem>>, %arg2: memref<32x256xbf16, #tpu.memory_space<vmem>>, %arg3: memref<1x256xf32, #tpu.memory_space<vmem>>, %arg4: memref<256x128xbf16, #tpu.memory_space<vmem>>, %arg5: memref<1x128xf32, #tpu.memory_space<vmem>>, %arg6: memref<16x2xf32, #tpu.memory_space<vmem>>) attributes {dimension_semantics = [#tpu.dimension_semantics<parallel>], iteration_bounds = array<i64: 2>, scalar_prefetch = 0 : i64, scratch_operands = 0 : i64, tpu.core_type = #tpu.core_type<tc>, window_params = [{transform_indices = @transform_0, window_bounds = array<i64: 16, 32>}, {pipeline_mode = #tpu.pipeline_mode<synchronous>, transform_indices = @transform_1, window_bounds = array<i64: 32, 256>}, {pipeline_mode = #tpu.pipeline_mode<synchronous>, transform_indices = @transform_2, window_bounds = array<i64: 1, 256>}, {pipeline_mode = #tpu.pipeline_mode<synchronous>, transform_indices = @transform_3, window_bounds = array<i64: 256, 128>}, {pipeline_mode = #tpu.pipeline_mode<synchronous>, transform_indices = @transform_4, window_bounds = array<i64: 1, 128>}, {transform_indices = @transform_5, window_bounds = array<i64: 16, 2>}]} {
    %c0 = arith.constant 0 : index
    %c0_0 = arith.constant 0 : index
    %0 = vector.load %arg1[%c0, %c0_0] : memref<16x32xf32, #tpu.memory_space<vmem>>, vector<16x32xf32>
    %1 = arith.truncf %0 : vector<16x32xf32> to vector<16x32xbf16>
    %c0_1 = arith.constant 0 : index
    %c0_2 = arith.constant 0 : index
    %2 = vector.load %arg2[%c0_1, %c0_2] : memref<32x256xbf16, #tpu.memory_space<vmem>>, vector<32x256xbf16>
    %cst = arith.constant dense<0.000000e+00> : vector<16x256xf32>
    %3 = tpu.matmul %1, %2, %cst {dimension_numbers = #tpu.dot_dimension_numbers<[1], [0], [0], [1], [0, 0, 1, 1], [], []>} : vector<16x32xbf16>, vector<32x256xbf16>, vector<16x256xf32> -> vector<16x256xf32>
    %c0_3 = arith.constant 0 : index
    %c0_4 = arith.constant 0 : index
    %4 = vector.load %arg3[%c0_3, %c0_4] : memref<1x256xf32, #tpu.memory_space<vmem>>, vector<1x256xf32>
    %5 = vector.broadcast %4 : vector<1x256xf32> to vector<16x256xf32>
    %6 = arith.addf %3, %5 : vector<16x256xf32>
    %cst_5 = arith.constant 0.000000e+00 : f32
    %7 = vector.broadcast %cst_5 : f32 to vector<16x256xf32>
    %8 = arith.maximumf %6, %7 : vector<16x256xf32>
    %9 = arith.truncf %8 : vector<16x256xf32> to vector<16x256xbf16>
    %c0_6 = arith.constant 0 : index
    %c0_7 = arith.constant 0 : index
    %10 = vector.load %arg4[%c0_6, %c0_7] : memref<256x128xbf16, #tpu.memory_space<vmem>>, vector<256x128xbf16>
    %cst_8 = arith.constant dense<0.000000e+00> : vector<16x128xf32>
    %11 = tpu.matmul %9, %10, %cst_8 {dimension_numbers = #tpu.dot_dimension_numbers<[1], [0], [0], [1], [0, 0, 1, 1], [], []>} : vector<16x256xbf16>, vector<256x128xbf16>, vector<16x128xf32> -> vector<16x128xf32>
    %c0_9 = arith.constant 0 : index
    %c0_10 = arith.constant 0 : index
    %12 = vector.load %arg5[%c0_9, %c0_10] : memref<1x128xf32, #tpu.memory_space<vmem>>, vector<1x128xf32>
    %13 = vector.broadcast %12 : vector<1x128xf32> to vector<16x128xf32>
    %14 = arith.addf %11, %13 : vector<16x128xf32>
    %15 = vector.extract_strided_slice %14 {offsets = [0, 0], sizes = [16, 2], strides = [1, 1]} : vector<16x128xf32> to vector<16x2xf32>
    %c0_11 = arith.constant 0 : index
    %c0_12 = arith.constant 0 : index
    %16 = vector.load %arg6[%c0_11, %c0_12] : memref<16x2xf32, #tpu.memory_space<vmem>>, vector<16x2xf32>
    tpu.vector_store %arg6[%c0_11, %c0_12], %15 {strides = array<i32>} : memref<16x2xf32, #tpu.memory_space<vmem>>, vector<16x2xf32>,
    return
  }
  func.func @transform_0(%arg0: i32) -> (i32, i32) {
    %c0_i32 = arith.constant 0 : i32
    %c0_i32_0 = arith.constant 0 : i32
    return %arg0, %c0_i32 : i32, i32
  }
  func.func @transform_1(%arg0: i32) -> (i32, i32) {
    %c0_i32 = arith.constant 0 : i32
    %c0_i32_0 = arith.constant 0 : i32
    %c0_i32_1 = arith.constant 0 : i32
    return %c0_i32, %c0_i32_0 : i32, i32
  }
  func.func @transform_2(%arg0: i32) -> (i32, i32) {
    %c0_i32 = arith.constant 0 : i32
    %c0_i32_0 = arith.constant 0 : i32
    %c0_i32_1 = arith.constant 0 : i32
    return %c0_i32, %c0_i32_0 : i32, i32
  }
  func.func @transform_3(%arg0: i32) -> (i32, i32) {
    %c0_i32 = arith.constant 0 : i32
    %c0_i32_0 = arith.constant 0 : i32
    %c0_i32_1 = arith.constant 0 : i32
    return %c0_i32, %c0_i32_0 : i32, i32
  }
  func.func @transform_4(%arg0: i32) -> (i32, i32) {
    %c0_i32 = arith.constant 0 : i32
    %c0_i32_0 = arith.constant 0 : i32
    %c0_i32_1 = arith.constant 0 : i32
    return %c0_i32, %c0_i32_0 : i32, i32
  }
  func.func @transform_5(%arg0: i32) -> (i32, i32) {
    %c0_i32 = arith.constant 0 : i32
    %c0_i32_0 = arith.constant 0 : i32
    return %arg0, %c0_i32 : i32, i32
  }
}

</mosaic_0001>

<llo_original>
// kernel: tpu_custom_call.1
$region0: #{tpu_custom_call.1}
  #allocation0 [shape = 'u32[]', space=smem, size = 0x4, offset = 0x4, fixed_abs, tag = 'smem constant byte address 0x4 - core index']
  #allocation1 [shape = 'u32[144,128]{1,0:T(1,128)}', space=vmem, size = 0x12000, scoped, tag = 'internal scratch']
  %s0 = inlined_call_operand.hbm [shape: f32[32,32], index: 0, kind: input, shape index: {}]
  %s1 = inlined_call_operand.hbm [shape: bf16[32,256], index: 1, kind: input, shape index: {}]
  %s2 = inlined_call_operand.vmem [shape: f32[1,256], index: 2, kind: input, shape index: {}]
  %s3 = inlined_call_operand.hbm [shape: bf16[256,128], index: 3, kind: input, shape index: {}]
  %s4 = inlined_call_operand.vmem [shape: f32[1,128], index: 4, kind: input, shape index: {}]
  %s5 = inlined_call_operand.vmem [shape: f32[32,2], index: 5, kind: output, shape index: {}]
  %s6 = sld [smem:[#allocation0]]
  $region65: #{tpu_custom_call.1} parent=0
    _
  %s8 = ssub.s32 1, %s6
  %s9 = scalar_select 0, %s8, %s6
  $region1: #{tpu_custom_call.1} parent=0
    #allocation2 [shape = 'u8[16384]{0}', space=vmem, size = 0x4000, scoped, tag = 'input window, operand 0']
    #allocation3 [shape = 's32[2]{0}', space=sflag, size = 0x8, scoped, tag = 'scoped memory for tpu_custom_call.1']
    #allocation4 [shape = 'u8[16384]{0}', space=vmem, size = 0x4000, scoped, tag = 'input window, operand 1, single buffered']
    #allocation5 [shape = 's32[1]{0}', space=sflag, size = 0x4, scoped, tag = 'scoped memory for tpu_custom_call.1']
    #allocation6 [shape = 'u8[65536]{0}', space=vmem, size = 0x10000, scoped, tag = 'input window, operand 3, single buffered']
    %10 = vsyncpa [#allocation3], 0
    %s11 = scalar_lea.sflag [#allocation3], 1
    %12 = vsyncpa %s11, 0
    %13 = vsyncpa [#allocation5], 0
    loop: start=0, step=1, limit=4
    $region2: #{tpu_custom_call.1} parent=1 // loop_pre_header
      _
    $region3: #{tpu_custom_call.1} parent=1 // loop_header
      %s15 = sphi 0, %s19
      %p16 = scmp.ge.s32.totalorder %s15, 4
      %s25 = sphi 0, %s27
      %s28 = sphi 0, %s25
      %s29 = sphi 0, %s28
      %s45 = sphi 0, %s29
      %s49 = sphi 0, %s49
      %s51 = sphi 0, %s49
      %s52 = sphi 0, %s51
      %s66 = sphi 0, %s52
      %s70 = sphi 0, %s70
      %s72 = sphi 0, %s70
      %s73 = sphi 0, %s72
      %s87 = sphi 0, %s73
      %s91 = sphi 0, %s91
      %s93 = sphi 0, %s91
      %s94 = sphi 0, %s93
      %s108 = sphi 0, %s94
      %s112 = sphi 0, %s112
      %s114 = sphi 0, %s112
      %s115 = sphi 0, %s114
      %s129 = sphi 0, %s115
      %s135 = sphi 0, %s137
      %s138 = sphi 0, %s135
      %s139 = sphi 0, %s138
      %s155 = sphi 0, %s139
    $region4: #{tpu_custom_call.1} parent=1 // loop_header_branch
      %18 = sbr.rel (%p16) target = $region8
    $region5: #{tpu_custom_call.1} parent=1 // loop_body
      %s20 = ssub.s32 %s15, 1
      %s21 = ssub.s32 %s15, 2
      %s22 = sadd.s32 %s15, 1
      %s23 = ssub.s32 %s15, %s22
      %p24 = scmp.eq.s32.totalorder %s23, 0
      %s26 = sadd.s32 %s25, 1
      %s27 = scalar_select %p24, %s25, %s26
      %p30 = pneg %p24
      %p31 = scmp.eq.s32.totalorder %s15, 1
      %p32 = por %p30, %p31
      %p33 = scmp.ne.s32.totalorder %s25, %s28
      %p34 = scmp.eq.s32.totalorder %s15, 0
      %p35 = por %p33, %p34
      %p36 = scmp.ne.s32.totalorder %s25, %s28
      %p37 = scmp.eq.s32.totalorder %s20, 1
      %p38 = por %p36, %p37
      %p39 = scmp.ne.s32.totalorder %s28, %s29
      %p40 = scmp.eq.s32.totalorder %s20, 0
      %p41 = por %p39, %p40
      %p42 = scmp.ne.s32.totalorder %s28, %s29
      %p43 = scmp.eq.s32.totalorder %s21, 1
      %p44 = por %p42, %p43
      %p46 = scmp.ne.s32.totalorder %s29, %s45
      %p47 = scmp.eq.s32.totalorder %s21, 0
      %p48 = por %p46, %p47
      %s50 = sadd.s32 %s49, 1
      %p53 = scmp.eq.s32.totalorder %s15, 1
      %p54 = scmp.ne.s32.totalorder %s49, %s51
      %p55 = scmp.eq.s32.totalorder %s15, 0
      %p56 = por %p54, %p55
      %p57 = scmp.ne.s32.totalorder %s49, %s51
      %p58 = scmp.eq.s32.totalorder %s20, 1
      %p59 = por %p57, %p58
      %p60 = scmp.ne.s32.totalorder %s51, %s52
      %p61 = scmp.eq.s32.totalorder %s20, 0
      %p62 = por %p60, %p61
      %p63 = scmp.ne.s32.totalorder %s51, %s52
      %p64 = scmp.eq.s32.totalorder %s21, 1
      %p65 = por %p63, %p64
      %p67 = scmp.ne.s32.totalorder %s52, %s66
      %p68 = scmp.eq.s32.totalorder %s21, 0
      %p69 = por %p67, %p68
      %s71 = sadd.s32 %s70, 1
      %p74 = scmp.eq.s32.totalorder %s15, 1
      %p75 = scmp.ne.s32.totalorder %s70, %s72
      %p76 = scmp.eq.s32.totalorder %s15, 0
      %p77 = por %p75, %p76
      %p78 = scmp.ne.s32.totalorder %s70, %s72
      %p79 = scmp.eq.s32.totalorder %s20, 1
      %p80 = por %p78, %p79
      %p81 = scmp.ne.s32.totalorder %s72, %s73
      %p82 = scmp.eq.s32.totalorder %s20, 0
      %p83 = por %p81, %p82
      %p84 = scmp.ne.s32.totalorder %s72, %s73
      %p85 = scmp.eq.s32.totalorder %s21, 1
      %p86 = por %p84, %p85
      %p88 = scmp.ne.s32.totalorder %s73, %s87
      %p89 = scmp.eq.s32.totalorder %s21, 0
      %p90 = por %p88, %p89
      %s92 = sadd.s32 %s91, 1
      %p95 = scmp.eq.s32.totalorder %s15, 1
      %p96 = scmp.ne.s32.totalorder %s91, %s93
      %p97 = scmp.eq.s32.totalorder %s15, 0
      %p98 = por %p96, %p97
      %p99 = scmp.ne.s32.totalorder %s91, %s93
      %p100 = scmp.eq.s32.totalorder %s20, 1
      %p101 = por %p99, %p100
      %p102 = scmp.ne.s32.totalorder %s93, %s94
      %p103 = scmp.eq.s32.totalorder %s20, 0
      %p104 = por %p102, %p103
      %p105 = scmp.ne.s32.totalorder %s93, %s94
      %p106 = scmp.eq.s32.totalorder %s21, 1
      %p107 = por %p105, %p106
      %p109 = scmp.ne.s32.totalorder %s94, %s108
      %p110 = scmp.eq.s32.totalorder %s21, 0
      %p111 = por %p109, %p110
      %s113 = sadd.s32 %s112, 1
      %p116 = scmp.eq.s32.totalorder %s15, 1
      %p117 = scmp.ne.s32.totalorder %s112, %s114
      %p118 = scmp.eq.s32.totalorder %s15, 0
      %p119 = por %p117, %p118
      %p120 = scmp.ne.s32.totalorder %s112, %s114
      %p121 = scmp.eq.s32.totalorder %s20, 1
      %p122 = por %p120, %p121
      %p123 = scmp.ne.s32.totalorder %s114, %s115
      %p124 = scmp.eq.s32.totalorder %s20, 0
      %p125 = por %p123, %p124
      %p126 = scmp.ne.s32.totalorder %s114, %s115
      %p127 = scmp.eq.s32.totalorder %s21, 1
      %p128 = por %p126, %p127
      %p130 = scmp.ne.s32.totalorder %s115, %s129
      %p131 = scmp.eq.s32.totalorder %s21, 0
      %p132 = por %p130, %p131
      %s133 = ssub.s32 %s15, %s22
      %p134 = scmp.eq.s32.totalorder %s133, 0
      %s136 = sadd.s32 %s135, 1
      %s137 = scalar_select %p134, %s135, %s136
      %p140 = pneg %p134
      %p141 = scmp.eq.s32.totalorder %s15, 1
      %p142 = por %p140, %p141
      %p143 = scmp.ne.s32.totalorder %s135, %s138
      %p144 = scmp.eq.s32.totalorder %s15, 0
      %p145 = por %p143, %p144
      %p146 = scmp.ne.s32.totalorder %s135, %s138
      %p147 = scmp.eq.s32.totalorder %s20, 1
      %p148 = por %p146, %p147
      %p149 = scmp.ne.s32.totalorder %s138, %s139
      %p150 = scmp.eq.s32.totalorder %s20, 0
      %p151 = por %p149, %p150
      %p152 = scmp.ne.s32.totalorder %s138, %s139
      %p153 = scmp.eq.s32.totalorder %s21, 1
      %p154 = por %p152, %p153
      %p156 = scmp.ne.s32.totalorder %s139, %s155
      %p157 = scmp.eq.s32.totalorder %s21, 0
      %p158 = por %p156, %p157
      %p159 = scmp.le.s32.totalorder 1, %s15
      %p160 = scmp.lt.s32.totalorder %s15, 3
      %p161 = pnand %p159, %p160
      %p162 = pneg %p161
      // Predicated region
      $region9: #{tpu_custom_call.1} parent=5 // pred_check
        _
      $region10: #{tpu_custom_call.1} parent=5 // pred_check_branch
        %164 = sbr.rel (%p161) target = $region12
      $region11: #{tpu_custom_call.1} parent=5 // pred_region
        %s165 = ssub.s32 %s15, 1
        // Predicated region
        $region13: #{tpu_custom_call.1} parent=11 // pred_check
          %p166 = pneg %p62
        $region14: #{tpu_custom_call.1} parent=11 // pred_check_branch
          %168 = sbr.rel (%p166) target = $region16
        $region15: #{tpu_custom_call.1} parent=11 // pred_region
          %s170 = ssub.s32 512, 512
          %171 = vsyncadd [#allocation5], %s170
          %s172 = sshll.u32 [#allocation4], 4
          %s173 = int_to_ptr.vmem [resolvable:$true] %s172
          %178 = dma.hbm_to_vmem [thread:$0]  %s1, 512, %s173, [#allocation5], 128, 128, 8
        $region16: #{tpu_custom_call.1} parent=11 // pred_fallthru
          _
        // Predicated region
        $region17: #{tpu_custom_call.1} parent=11 // pred_check
          %p179 = pneg %p83
        $region18: #{tpu_custom_call.1} parent=11 // pred_check_branch
          %181 = sbr.rel (%p179) target = $region20
        $region19: #{tpu_custom_call.1} parent=11 // pred_region
          _
        $region20: #{tpu_custom_call.1} parent=11 // pred_fallthru
          _
        // Predicated region
        $region21: #{tpu_custom_call.1} parent=11 // pred_check
          %p182 = pneg %p104
        $region22: #{tpu_custom_call.1} parent=11 // pred_check_branch
          %184 = sbr.rel (%p182) target = $region24
        $region23: #{tpu_custom_call.1} parent=11 // pred_region
          %s186 = ssub.s32 2048, 2048
          %187 = vsyncadd [#allocation5], %s186
          %s188 = sshll.u32 [#allocation6], 4
          %s189 = int_to_ptr.vmem [resolvable:$true] %s188
          %194 = dma.hbm_to_vmem [thread:$0]  %s3, 2048, %s189, [#allocation5], 64, 64, 4
        $region24: #{tpu_custom_call.1} parent=11 // pred_fallthru
          _
        // Predicated region
        $region25: #{tpu_custom_call.1} parent=11 // pred_check
          %p195 = pneg %p125
        $region26: #{tpu_custom_call.1} parent=11 // pred_check_branch
          %197 = sbr.rel (%p195) target = $region28
        $region27: #{tpu_custom_call.1} parent=11 // pred_region
          _
        $region28: #{tpu_custom_call.1} parent=11 // pred_fallthru
          _
      $region12: #{tpu_custom_call.1} parent=5 // pred_fallthru
        _
      %p198 = scmp.lt.s32.totalorder %s15, 2
      // Predicated region
      $region29: #{tpu_custom_call.1} parent=5 // pred_check
        %p199 = pneg %p198
      $region30: #{tpu_custom_call.1} parent=5 // pred_check_branch
        %201 = sbr.rel (%p199) target = $region32
      $region31: #{tpu_custom_call.1} parent=5 // pred_region
        // Predicated region
        $region33: #{tpu_custom_call.1} parent=31 // pred_check
          %p202 = pneg %p35
        $region34: #{tpu_custom_call.1} parent=31 // pred_check_branch
          %204 = sbr.rel (%p202) target = $region36
        $region35: #{tpu_custom_call.1} parent=31 // pred_region
          %s205 = sand.u32 %s25, 1
          %s206 = scalar_lea.sflag [#allocation3], %s205
          %s207 = sand.u32 %s25, 1
          %s208 = smul.addr %s207, 16
          %s209 = scalar_lea.vmem [#allocation2], %s208
          %s210 = smul.u32 2, %s15
          %s212 = ssub.s32 256, 256
          %213 = vsyncadd %s206, %s212
          %s214 = smul.addr %s210, 128
          %s215 = scalar_lea.hbm %s0, %s214
          %s216 = sshll.u32 %s209, 4
          %s217 = int_to_ptr.vmem [resolvable:$true] %s216
          %222 = dma.hbm_to_vmem [thread:$0]  %s215, 256, %s217, %s206, 128, 128, 8
        $region36: #{tpu_custom_call.1} parent=31 // pred_fallthru
          _
      $region32: #{tpu_custom_call.1} parent=5 // pred_fallthru
        _
      %p223 = scmp.le.s32.totalorder 1, %s15
      %p224 = scmp.lt.s32.totalorder %s15, 3
      %p225 = pnand %p223, %p224
      %p226 = pneg %p225
      // Predicated region
      $region37: #{tpu_custom_call.1} parent=5 // pred_check
        _
      $region38: #{tpu_custom_call.1} parent=5 // pred_check_branch
        %228 = sbr.rel (%p225) target = $region40
      $region39: #{tpu_custom_call.1} parent=5 // pred_region
        %s229 = ssub.s32 %s15, 1
        %s230 = sand.u32 %s28, 1
        %s231 = scalar_lea.sflag [#allocation3], %s230
        %s232 = sand.u32 %s28, 1
        %s233 = smul.addr %s232, 16
        %s234 = scalar_lea.vmem [#allocation2], %s233
        // Predicated region
        $region41: #{tpu_custom_call.1} parent=39 // pred_check
          %p235 = pneg %p41
        $region42: #{tpu_custom_call.1} parent=39 // pred_check_branch
          %237 = sbr.rel (%p235) target = $region44
        $region43: #{tpu_custom_call.1} parent=39 // pred_region
          %238 = dma.done %s231, 256
        $region44: #{tpu_custom_call.1} parent=39 // pred_fallthru
          _
        // Predicated region
        $region45: #{tpu_custom_call.1} parent=39 // pred_check
          %p239 = pneg %p62
        $region46: #{tpu_custom_call.1} parent=39 // pred_check_branch
          %241 = sbr.rel (%p239) target = $region48
        $region47: #{tpu_custom_call.1} parent=39 // pred_region
          %242 = dma.done [#allocation5], 512
        $region48: #{tpu_custom_call.1} parent=39 // pred_fallthru
          _
        // Predicated region
        $region49: #{tpu_custom_call.1} parent=39 // pred_check
          %p243 = pneg %p104
        $region50: #{tpu_custom_call.1} parent=39 // pred_check_branch
          %245 = sbr.rel (%p243) target = $region52
        $region51: #{tpu_custom_call.1} parent=39 // pred_region
          %246 = dma.done [#allocation5], 2048
        $region52: #{tpu_custom_call.1} parent=39 // pred_fallthru
          _
        %s247 = sand.u32 %s28, 1
        %s248 = scalar_lea.sflag [#allocation3], %s247
        %s249 = sand.u32 %s28, 1
        %s250 = smul.addr %s249, 16
        %s251 = scalar_lea.vmem [#allocation2], %s250
        %p252 = pneg %p41
        %p253 = pneg %p38
        %p254 = pneg %p62
        %p255 = pneg %p59
        %p256 = pneg %p83
        %p257 = pneg %p80
        %p258 = pneg %p104
        %p259 = pneg %p101
        %p260 = pneg %p125
        %p261 = pneg %p122
        %p262 = pneg %p151
        %p263 = pneg %p148
        %s264 = smul.u32 2, %s20
        %p265 = scmp.lt.s32.totalorder %s264, 3
        %s266 = scalar_select %p265, %s264, 3
        %s267 = smul.addr %s266, 8
        %s268 = scalar_lea.vmem %s5, %s267
        %s269 = smul.u32 2, %s20
        %s270 = smul.u32 2, %s20
        %p271 = scmp.lt.s32.totalorder %s270, 3
        %s272 = scalar_select %p271, %s270, 3
        %s273 = smul.addr %s272, 8
        %s274 = scalar_lea.vmem %s5, %s273
        %s275 = smul.u32 2, %s20
        %v277 = vld [vmem:[%s234] sm:$0xff]
        %v278 = vld [vmem:[%s234 + $0x8] sm:$0xff]
        %v279 = vpack.c.bf16 %v278, %v277
        %v280 = vld [vmem:[#allocation4] sm:$0xff]
        %v281 = vld [vmem:[#allocation4 + $0x8] sm:$0xff]
        %v282 = vld [vmem:[#allocation4 + $0x10] sm:$0xff]
        %v283 = vld [vmem:[#allocation4 + $0x18] sm:$0xff]
        %v284 = vld [vmem:[%s2] sm:$0x3]
        %v286 = vlaneseq
        %v287 = vshrl.u32 %v286, 7
        %v288 = vsub.s32 0, %v287
        %v289 = vrot.slane %v284, %v288
        %v290 = vlaneseq
        %v291 = vshrl.u32 %v290, 7
        %v292 = vsub.s32 1, %v291
        %v293 = vrot.slane %v284, %v292
        %v300 = vunpack.c.l.b16 %v280
        %v301 = vunpack.c.h.b16 %v280
        %v302 = vunpack.c.l.b16 %v281
        %v303 = vunpack.c.h.b16 %v281
        %v304 = vunpack.c.l.b16 %v282
        %v305 = vunpack.c.h.b16 %v282
        %v306 = vunpack.c.l.b16 %v283
        %v307 = vunpack.c.h.b16 %v283
        %v308 = vpack.c.b16 %v302, %v300
        %v309 = vpack.c.b16 %v303, %v301
        %v310 = vpack.c.b16 %v306, %v304
        %v311 = vpack.c.b16 %v307, %v305
        %vm316 = vcmask 261120
        %v318 = vsel %vm316, %v279, 0
        %320 = vmatprep.subr.bf16.mxu0 0
        %321 = vmatpush1.bf16.msra.mxu0 0
        %322 = vmatprep.subr.bf16.mxu0 0
        %323 = vmatpush1.bf16.msra.mxu0 0
        %324 = vmatprep.subr.bf16.mxu0 0
        %325 = vmatpush1.bf16.msra.mxu0 0
        %326 = vmatprep.subr.bf16.mxu0 0
        %327 = vmatpush1.bf16.msra.mxu0 0
        %328 = vmatprep.subr.bf16.mxu0 0
        %329 = vmatpush1.bf16.msra.mxu0 0
        %330 = vmatprep.subr.bf16.mxu0 0
        %331 = vmatpush1.bf16.msra.mxu0 0
        %332 = vmatprep.subr.bf16.mxu0 %v311
        %333 = vmatpush1.bf16.msra.mxu0 %v310
        %334 = vmatprep.subr.bf16.mxu0 %v309
        %335 = vmatpush1.bf16.msra.mxu0 %v308
        %336 = vmatprep.subr.bf16.mxu0 0
        %337 = vmatpush2.bf16.msra.mxu0 0
        %338 = vmatprep.subr.bf16.mxu0 0
        %339 = vmatpush2.bf16.msra.mxu0 0
        %340 = vmatprep.subr.bf16.mxu0 0
        %341 = vmatpush2.bf16.msra.mxu0 0
        %342 = vmatprep.subr.bf16.mxu0 0
        %343 = vmatpush2.bf16.msra.mxu0 0
        %344 = vmatprep.subr.bf16.mxu0 0
        %345 = vmatpush2.bf16.msra.mxu0 0
        %346 = vmatprep.subr.bf16.mxu0 0
        %347 = vmatpush2.bf16.msra.mxu0 0
        %348 = vmatprep.subr.bf16.mxu0 0
        %349 = vmatpush2.bf16.msra.mxu0 0
        %350 = vmatprep.subr.bf16.mxu0 0
        %351 = vmatpush2.bf16.msra.mxu0 0
        %352 = vmatprep.mubr.bf16.mxu0 0
        %353 = vmatmul.mubr.bf16.gmra.mxu0 %v318
        %v354 = vpop.f32.mrf.mxu0
        %v355 = vadd.f32 %v289, %v354
        %v356 = vpop.f32.mrf.mxu0
        %v357 = vadd.f32 %v293, %v356
        %v358 = vpop.f32.mrf.mxu0
        %v359 = vadd.f32 %v289, %v358
        %v360 = vpop.f32.mrf.mxu0
        %v361 = vadd.f32 %v293, %v360
        %362 = vdwg.mxu0
        %v363 = vmax.f32 %v355, 0.0
        %v364 = vmax.f32 %v357, 0.0
        %v365 = vmax.f32 %v359, 0.0
        %v366 = vmax.f32 %v361, 0.0
        %v367 = vpack.c.bf16 %v365, %v363
        %v368 = vpack.c.bf16 %v366, %v364
        %v369 = vld [vmem:[#allocation6] sm:$0xf]
        %v370 = vld [vmem:[#allocation6 + $0x4] sm:$0xf]
        %v371 = vld [vmem:[#allocation6 + $0x8] sm:$0xf]
        %v372 = vld [vmem:[#allocation6 + $0xc] sm:$0xf]
        %v373 = vld [vmem:[#allocation6 + $0x10] sm:$0xf]
        %v374 = vld [vmem:[#allocation6 + $0x14] sm:$0xf]
        %v375 = vld [vmem:[#allocation6 + $0x18] sm:$0xf]
        %v376 = vld [vmem:[#allocation6 + $0x1c] sm:$0xf]
        %v377 = vld [vmem:[#allocation6 + $0x20] sm:$0xf]
        %v378 = vld [vmem:[#allocation6 + $0x24] sm:$0xf]
        %v379 = vld [vmem:[#allocation6 + $0x28] sm:$0xf]
        %v380 = vld [vmem:[#allocation6 + $0x2c] sm:$0xf]
        %v381 = vld [vmem:[#allocation6 + $0x30] sm:$0xf]
        %v382 = vld [vmem:[#allocation6 + $0x34] sm:$0xf]
        %v383 = vld [vmem:[#allocation6 + $0x38] sm:$0xf]
        %v384 = vld [vmem:[#allocation6 + $0x3c] sm:$0xf]
        %v385 = vld [vmem:[#allocation6 + $0x40] sm:$0xf]
        %v386 = vld [vmem:[#allocation6 + $0x44] sm:$0xf]
        %v387 = vld [vmem:[#allocation6 + $0x48] sm:$0xf]
        %v388 = vld [vmem:[#allocation6 + $0x4c] sm:$0xf]
        %v389 = vld [vmem:[#allocation6 + $0x50] sm:$0xf]
        %v390 = vld [vmem:[#allocation6 + $0x54] sm:$0xf]
        %v391 = vld [vmem:[#allocation6 + $0x58] sm:$0xf]
        %v392 = vld [vmem:[#allocation6 + $0x5c] sm:$0xf]
        %v393 = vld [vmem:[#allocation6 + $0x60] sm:$0xf]
        %v394 = vld [vmem:[#allocation6 + $0x64] sm:$0xf]
        %v395 = vld [vmem:[#allocation6 + $0x68] sm:$0xf]
        %v396 = vld [vmem:[#allocation6 + $0x6c] sm:$0xf]
        %v397 = vld [vmem:[#allocation6 + $0x70] sm:$0xf]
        %v398 = vld [vmem:[#allocation6 + $0x74] sm:$0xf]
        %v399 = vld [vmem:[#allocation6 + $0x78] sm:$0xf]
        %v400 = vld [vmem:[#allocation6 + $0x7c] sm:$0xf]
        %v401 = vld [vmem:[%s4] sm:$0x1]
        %v403 = vlaneseq
        %v404 = vshrl.u32 %v403, 7
        %v405 = vsub.s32 0, %v404
        %v406 = vrot.slane %v401, %v405
        %v440 = vunpack.c.l.b16 %v369
        %v441 = vunpack.c.l.b16 %v370
        %v442 = vunpack.c.l.b16 %v371
        %v443 = vunpack.c.l.b16 %v372
        %v444 = vunpack.c.l.b16 %v373
        %v445 = vunpack.c.l.b16 %v374
        %v446 = vunpack.c.l.b16 %v375
        %v447 = vunpack.c.l.b16 %v376
        %v448 = vunpack.c.l.b16 %v377
        %v449 = vunpack.c.l.b16 %v378
        %v450 = vunpack.c.l.b16 %v379
        %v451 = vunpack.c.l.b16 %v380
        %v452 = vunpack.c.l.b16 %v381
        %v453 = vunpack.c.l.b16 %v382
        %v454 = vunpack.c.l.b16 %v383
        %v455 = vunpack.c.l.b16 %v384
        %v456 = vunpack.c.l.b16 %v385
        %v457 = vunpack.c.l.b16 %v386
        %v458 = vunpack.c.l.b16 %v387
        %v459 = vunpack.c.l.b16 %v388
        %v460 = vunpack.c.l.b16 %v389
        %v461 = vunpack.c.l.b16 %v390
        %v462 = vunpack.c.l.b16 %v391
        %v463 = vunpack.c.l.b16 %v392
        %v464 = vunpack.c.l.b16 %v393
        %v465 = vunpack.c.l.b16 %v394
        %v466 = vunpack.c.l.b16 %v395
        %v467 = vunpack.c.l.b16 %v396
        %v468 = vunpack.c.l.b16 %v397
        %v469 = vunpack.c.l.b16 %v398
        %v470 = vunpack.c.l.b16 %v399
        %v471 = vunpack.c.l.b16 %v400
        %v472 = vpack.c.b16 %v441, %v440
        %v473 = vpack.c.b16 %v443, %v442
        %v474 = vpack.c.b16 %v445, %v444
        %v475 = vpack.c.b16 %v447, %v446
        %v476 = vpack.c.b16 %v449, %v448
        %v477 = vpack.c.b16 %v451, %v450
        %v478 = vpack.c.b16 %v453, %v452
        %v479 = vpack.c.b16 %v455, %v454
        %v480 = vpack.c.b16 %v457, %v456
        %v481 = vpack.c.b16 %v459, %v458
        %v482 = vpack.c.b16 %v461, %v460
        %v483 = vpack.c.b16 %v463, %v462
        %v484 = vpack.c.b16 %v465, %v464
        %v485 = vpack.c.b16 %v467, %v466
        %v486 = vpack.c.b16 %v469, %v468
        %v487 = vpack.c.b16 %v471, %v470
        %504 = vmatprep.subr.bf16.mxu0 0
        %505 = vmatpush1.bf16.msra.mxu0 %v479
        %506 = vmatprep.subr.bf16.mxu0 0
        %507 = vmatpush1.bf16.msra.mxu0 %v478
        %508 = vmatprep.subr.bf16.mxu0 0
        %509 = vmatpush1.bf16.msra.mxu0 %v477
        %510 = vmatprep.subr.bf16.mxu0 0
        %511 = vmatpush1.bf16.msra.mxu0 %v476
        %512 = vmatprep.subr.bf16.mxu0 0
        %513 = vmatpush1.bf16.msra.mxu0 %v475
        %514 = vmatprep.subr.bf16.mxu0 0
        %515 = vmatpush1.bf16.msra.mxu0 %v474
        %516 = vmatprep.subr.bf16.mxu0 0
        %517 = vmatpush1.bf16.msra.mxu0 %v473
        %518 = vmatprep.subr.bf16.mxu0 0
        %519 = vmatpush1.bf16.msra.mxu0 %v472
        %520 = vmatprep.subr.bf16.mxu0 0
        %521 = vmatpush2.bf16.msra.mxu0 %v487
        %522 = vmatprep.subr.bf16.mxu0 0
        %523 = vmatpush2.bf16.msra.mxu0 %v486
        %524 = vmatprep.subr.bf16.mxu0 0
        %525 = vmatpush2.bf16.msra.mxu0 %v485
        %526 = vmatprep.subr.bf16.mxu0 0
        %527 = vmatpush2.bf16.msra.mxu0 %v484
        %528 = vmatprep.subr.bf16.mxu0 0
        %529 = vmatpush2.bf16.msra.mxu0 %v483
        %530 = vmatprep.subr.bf16.mxu0 0
        %531 = vmatpush2.bf16.msra.mxu0 %v482
        %532 = vmatprep.subr.bf16.mxu0 0
        %533 = vmatpush2.bf16.msra.mxu0 %v481
        %534 = vmatprep.subr.bf16.mxu0 0
        %535 = vmatpush2.bf16.msra.mxu0 %v480
        %536 = vmatprep.mubr.bf16.mxu0 %v368
        %537 = vmatmul.mubr.bf16.gmra.mxu0 %v367
        %v538 = vpop.f32.mrf.mxu0
        %v539 = vadd.f32 %v406, %v538
        %v540 = vpop.f32.mrf.mxu0
        %v541 = vpop.f32.mrf.mxu0
        %v542 = vadd.f32 %v406, %v541
        %v543 = vpop.f32.mrf.mxu0
        %544 = vdwg.mxu0
        %vm545 = vcmask 15360
        %546 = vst.msk [vmem:[%s274] sm:$0xff] %vm545, %v539
        %547 = vst.msk [vmem:[%s274 + $0x8] sm:$0xff] %vm545, %v542
        %s548 = smul.u32 2, %s20
        %p549 = scmp.lt.s32.totalorder %s548, 3
        %s550 = scalar_select %p549, %s548, 3
        %s551 = smul.addr %s550, 8
        %s552 = scalar_lea.vmem %s5, %s551
        // Predicated region
        $region53: #{tpu_custom_call.1} parent=39 // pred_check
          %p553 = pneg %p148
        $region54: #{tpu_custom_call.1} parent=39 // pred_check_branch
          %555 = sbr.rel (%p553) target = $region56
        $region55: #{tpu_custom_call.1} parent=39 // pred_region
          %s556 = smul.u32 2, %s20
        $region56: #{tpu_custom_call.1} parent=39 // pred_fallthru
          _
      $region40: #{tpu_custom_call.1} parent=5 // pred_fallthru
        _
      %p557 = scmp.le.s32.totalorder 2, %s15
      // Predicated region
      $region57: #{tpu_custom_call.1} parent=5 // pred_check
        %p558 = pneg %p557
      $region58: #{tpu_custom_call.1} parent=5 // pred_check_branch
        %560 = sbr.rel (%p558) target = $region60
      $region59: #{tpu_custom_call.1} parent=5 // pred_region
        %s561 = ssub.s32 %s15, 2
        // Predicated region
        $region61: #{tpu_custom_call.1} parent=59 // pred_check
          %p562 = pneg %p154
        $region62: #{tpu_custom_call.1} parent=59 // pred_check_branch
          %564 = sbr.rel (%p562) target = $region64
        $region63: #{tpu_custom_call.1} parent=59 // pred_region
          %s565 = smul.u32 2, %s21
          %p566 = scmp.lt.s32.totalorder %s565, 3
          %s567 = scalar_select %p566, %s565, 3
          %s568 = smul.addr %s567, 8
          %s569 = scalar_lea.vmem %s5, %s568
        $region64: #{tpu_custom_call.1} parent=59 // pred_fallthru
          _
      $region60: #{tpu_custom_call.1} parent=5 // pred_fallthru
        _
    $region6: #{tpu_custom_call.1} parent=1 // loop_footer
      %s19 = sadd.s32 1, %s15
    $region7: #{tpu_custom_call.1} parent=1 // loop_footer_branch
      %14 = sbr.rel target = $region3
    $region8: #{tpu_custom_call.1} parent=1 // loop_exit
      _
    %570 = vsyncpa [#allocation3], 1
    %s571 = scalar_lea.sflag [#allocation3], 1
    %572 = vsyncpa %s571, 1
    %573 = vsyncpa [#allocation5], 1

</llo_original>
